<compile_context>
chip_gen: v5e
topology: v5e:2x2
jax: 0.10.0
libtpu: 0.0.40
codegen_flags: <defaults>
</compile_context>

<pallas_src>
import functools

import jax
import jax.numpy as jnp
from jax import lax
from jax.experimental import pallas as pl
from jax.experimental.pallas import tpu as pltpu


def _round_up(a, b):
    return (a + b - 1) // b * b


def _vmem_budget_bytes():
    """Per-core VMEM budget with headroom (generation-aware; v7x has 64 MiB/TC)."""
    try:
        cap = int(pltpu.get_tpu_info().vmem_capacity_bytes)
    except Exception:
        cap = 64 * 2 ** 20          # conservative fallback, safe on v5e/v6e/v7x
    return max(16 * 2 ** 20, (cap * 3) // 4)


# ----------------------------- Pallas kernel ---------------------------------
def _conv_mm_lrelu_kernel(w_ref, p_ref, b_ref, o_ref, acc_ref=None, *,
                          tile_k, k_blocks, slope):
    # w_ref:   (Cout_p, K_p)        bf16 spectrally-normalized weight, VMEM-resident
    # p_ref:   (1, tile_k, tile_m)  bf16 im2col patch tile (one batch element)
    # b_ref:   (Cout_p, 1)          f32 bias
    # o_ref:   (1, Cout_p, tile_m)  output tile (lane-dense last dim)
    # acc_ref: (Cout_p, tile_m)     f32 accumulator (only when k_blocks > 1)
    if k_blocks == 1:
        # Fast path: single full-K block -> no accumulator round-trip through VMEM.
        y = jnp.dot(w_ref[...], p_ref[0],
                    preferred_element_type=jnp.float32) + b_ref[...]
        o_ref[0] = jnp.where(y >= 0.0, y, slope * y).astype(o_ref.dtype)
        return

    ki = pl.program_id(2)

    @pl.when(ki == 0)
    def _init():
        # bias folded into the accumulator init (no bias add in the hot finalize)
        acc_ref[...] = jnp.broadcast_to(b_ref[...], acc_ref.shape)

    off = pl.multiple_of(ki * tile_k, tile_k)       # tile_k is a multiple of 128 here
    acc_ref[...] += jnp.dot(w_ref[:, pl.ds(off, tile_k)], p_ref[0],
                            preferred_element_type=jnp.float32)

    @pl.when(ki == pl.num_programs(2) - 1)
    def _finalize():
        y = acc_ref[...]
        o_ref[0] = jnp.where(y >= 0.0, y, slope * y).astype(o_ref.dtype)


def _conv_matmul_pallas(w_mat, patches, bias, *, tile_m, tile_k, out_dtype, slope):
    n, k_p, m_p = patches.shape
    cout_p, k_p_w = w_mat.shape
    assert k_p_w == k_p and m_p % tile_m == 0 and k_p % tile_k == 0
    k_blocks = k_p // tile_k
    grid = (n, m_p // tile_m, k_blocks)

    in_itemsize = jnp.dtype(w_mat.dtype).itemsize
    out_itemsize = jnp.dtype(out_dtype).itemsize
    working = (2 * tile_k * tile_m * in_itemsize      # double-buffered patch tile
               + 2 * cout_p * tile_m * out_itemsize   # double-buffered out tile
               + cout_p * k_p * in_itemsize           # resident weight
               + cout_p * 4)                          # bias
    if k_blocks > 1:
        working += cout_p * tile_m * 4                # f32 accumulator
    vmem_limit = int(min(_vmem_budget_bytes(), max(16 * 2 ** 20, 2 * working)))

    flops = 2 * n * m_p * k_p * cout_p
    bytes_accessed = (patches.size * in_itemsize + w_mat.size * in_itemsize
                      + bias.size * 4 + n * cout_p * m_p * out_itemsize)

    scratch = [] if k_blocks == 1 else [pltpu.VMEM((cout_p, tile_m), jnp.float32)]
    kernel = functools.partial(_conv_mm_lrelu_kernel, tile_k=tile_k,
                               k_blocks=k_blocks, slope=slope)

    return pl.pallas_call(
        kernel,
        out_shape=jax.ShapeDtypeStruct((n, cout_p, m_p), out_dtype),
        grid_spec=pltpu.PrefetchScalarGridSpec(
            num_scalar_prefetch=0,
            grid=grid,
            in_specs=[
                # full weight, constant index map -> DMA'd once, stays in VMEM
                pl.BlockSpec((cout_p, k_p), lambda b, mi, ki: (0, 0)),
                pl.BlockSpec((1, tile_k, tile_m), lambda b, mi, ki: (b, ki, mi)),
                pl.BlockSpec((cout_p, 1), lambda b, mi, ki: (0, 0)),
            ],
            out_specs=pl.BlockSpec((1, cout_p, tile_m),
                                   lambda b, mi, ki: (b, 0, mi)),
            scratch_shapes=scratch,
        ),
        compiler_params=pltpu.CompilerParams(
            # N and M tiles are independent -> shardable across v7x's 2 TensorCores;
            # K is the innermost reduction axis.
            dimension_semantics=("parallel", "parallel", "arbitrary"),
            vmem_limit_bytes=vmem_limit),
        cost_estimate=pl.CostEstimate(flops=flops, transcendentals=0,
                                      bytes_accessed=bytes_accessed),
    )(w_mat, patches, bias)


# ------------------------------ JAX glue --------------------------------------
def _select_tiles(k, m, cout_p, in_itemsize, out_itemsize, budget):
    """Static (Python) tile selection against the per-core VMEM budget."""
    if k <= 2048:                       # full-K single block: no K padding at all
        tile_k, k_p = k, k
    else:
        tile_k = 512                    # multiple of 128 -> aligned in-kernel slices
        k_p = _round_up(k, tile_k)
    k_blocks = k_p // tile_k

    m_p_min = _round_up(m, 128)
    tile_m = 128
    for cand in (2048, 1024, 512, 256, 128):
        tm = min(cand, m_p_min)
        need = (2 * tile_k * tm * in_itemsize
                + 2 * cout_p * tm * out_itemsize
                + cout_p * k_p * in_itemsize
                + cout_p * 4 + (1 << 20))
        if k_blocks > 1:
            need += cout_p * tm * 4
        if need <= budget:
            tile_m = tm
            break
    return tile_k, k_p, tile_m


def _im2col_nkm(x_nchw, kh, kw, stride, pad, m_p, dtype):
    """im2col directly in the kernel-native (N, K, M_p) layout.

    Taps are stacked on a new axis right after the channel axis, so K is ordered
    (Cin, KH, KW) -- matching weight.reshape(Cout, Cin*KH*KW) -- and the final
    reshape is a free contiguous reshape (no transpose pass). Per-image M padding
    is fused into the per-tap slices, so the 4x-sized im2col tensor is written to
    HBM exactly once.
    """
    n, c, h, w = x_nchw.shape
    xp = jnp.pad(x_nchw.astype(dtype), ((0, 0), (0, 0), (pad, pad), (pad, pad)))
    oh = (h + 2 * pad - kh) // stride + 1
    ow = (w + 2 * pad - kw) // stride + 1
    m = oh * ow
    taps = []
    for ih in range(kh):
        for iw in range(kw):
            t = xp[:, :, ih:ih + stride * oh:stride,
                   iw:iw + stride * ow:stride].reshape(n, c, m)
            if m_p != m:
                t = jnp.pad(t, ((0, 0), (0, 0), (0, m_p - m)))
            taps.append(t)
    return jnp.stack(taps, axis=2).reshape(n, c * kh * kw, m_p)


def _spectral_normalize(weight, u0, eps=1e-12):
    """One power iteration (PyTorch spectral_norm, n_power_iterations=1, training
    forward). NOTE: PyTorch persists the updated u buffer and runs the iteration
    under no_grad; thread u through callers / stop_gradient for training parity."""
    cout = weight.shape[0]
    w_mat = weight.reshape(cout, -1)                       # (Cout, K)
    u = u0 / (jnp.linalg.norm(u0) + eps)
    v = w_mat.T @ u
    v = v / (jnp.linalg.norm(v) + eps)
    u = w_mat @ v
    u = u / (jnp.linalg.norm(u) + eps)
    sigma = u @ (w_mat @ v)
    return weight / sigma


def simple_conv_block(x_nchw, weight, bias, u0, *, kernel_size=4, stride=2,
                      padding=1, negative_slope=0.2,
                      compute_dtype=jnp.bfloat16, out_dtype=jnp.float32):
    """Forward pass of SimpleConvBlock. x: [N, Cin, H, W] -> [N, Cout, OH, OW]."""
    cout, cin, kh, kw = weight.shape
    assert kh == kernel_size and kw == kernel_size
    n, _, h, w = x_nchw.shape
    oh = (h + 2 * padding - kh) // stride + 1
    ow = (w + 2 * padding - kw) // stride + 1
    k = cin * kh * kw
    m = oh * ow

    out_is_bf16 = jnp.dtype(out_dtype) == jnp.dtype(jnp.bfloat16)
    cout_p = _round_up(cout, 16 if out_is_bf16 else 8)
    tile_k, k_p, tile_m = _select_tiles(
        k, m, cout_p, jnp.dtype(compute_dtype).itemsize,
        jnp.dtype(out_dtype).itemsize, _vmem_budget_bytes())
    m_p = _round_up(m, tile_m)

    # spectral-norm power iteration stays in f32 (tiny, accuracy-critical)
    w_sn = _spectral_normalize(weight, u0)
    w_mat = w_sn.reshape(cout, k)
    w_pad = jnp.pad(w_mat, ((0, cout_p - cout), (0, k_p - k))).astype(compute_dtype)
    b_pad = jnp.pad(bias, (0, cout_p - cout)).reshape(cout_p, 1).astype(jnp.float32)

    patches = _im2col_nkm(x_nchw, kh, kw, stride, padding, m_p, compute_dtype)
    if k_p != k:   # only reached for very large Cin (K > 2048)
        patches = jnp.pad(patches, ((0, 0), (0, k_p - k), (0, 0)))

    out = _conv_matmul_pallas(w_pad, patches, b_pad, tile_m=tile_m, tile_k=tile_k,
                              out_dtype=out_dtype, slope=negative_slope)
    # (N, Cout_p, M_p) -> drop padding -> NCHW; no transpose needed.
    return out[:, :cout, :m].reshape(n, cout, oh, ow)


# ------------------------------- reference ------------------------------------
def _reference(x_nchw, weight, bias, u0, compute_dtype=jnp.bfloat16):
    """Same precision policy as the kernel: bf16 operands, f32 accumulation."""
    w_sn = _spectral_normalize(weight, u0)
    y = lax.conv_general_dilated(
        x_nchw.astype(compute_dtype), w_sn.astype(compute_dtype),
        window_strides=(2, 2), padding=((1, 1), (1, 1)),
        dimension_numbers=("NCHW", "OIHW", "NCHW"),
        preferred_element_type=jnp.float32)
    y = y + bias[None, :, None, None]
    return jnp.where(y >= 0, y, 0.2 * y)


if __name__ == "__main__":
    key = jax.random.PRNGKey(0)
    k_x, k_w, k_b, k_u = jax.random.split(key, 4)

    N, Cin, H, W = 2, 4, 16, 16
    Cout, KH, KW = 8, 4, 4

    x = jax.random.normal(k_x, (N, Cin, H, W), dtype=jnp.float32)
    weight = 0.1 * jax.random.normal(k_w, (Cout, Cin, KH, KW), dtype=jnp.float32)
    bias = 0.05 * jax.random.normal(k_b, (Cout,), dtype=jnp.float32)
    u0 = jax.random.normal(k_u, (Cout,), dtype=jnp.float32)  # spectral-norm power-iter vector

    fwd = jax.jit(functools.partial(simple_conv_block,
                                    kernel_size=4, stride=2, padding=1))
    out = jax.block_until_ready(fwd(x, weight, bias, u0))

    ref = jax.block_until_ready(_reference(x, weight, bias, u0))
    assert out.shape == (N, Cout, H // 2, W // 2), out.shape
    assert jnp.allclose(out, ref, rtol=1e-2, atol=1e-2), (
        "mismatch vs reference conv, max abs diff = "
        f"{float(jnp.max(jnp.abs(out - ref)))}")

    print("KERNEL_OK")
</pallas_src>

<mosaic_0001>
module attributes {stable_mosaic.version = 11 : i64} {
  func.func @_conv_mm_lrelu_kernel(%arg0: i32, %arg1: i32, %arg2: i32, %arg3: memref<8x64xbf16, #tpu.memory_space<vmem>>, %arg4: memref<1x64x128xbf16, #tpu.memory_space<vmem>>, %arg5: memref<8x1xf32, #tpu.memory_space<vmem>>, %arg6: memref<1x8x128xf32, #tpu.memory_space<vmem>>) attributes {dimension_semantics = [#tpu.dimension_semantics<parallel>, #tpu.dimension_semantics<parallel>, #tpu.dimension_semantics<arbitrary>], iteration_bounds = array<i64: 2, 1, 1>, scalar_prefetch = 0 : i64, scratch_operands = 0 : i64, tpu.core_type = #tpu.core_type<tc>, window_params = [{pipeline_mode = #tpu.pipeline_mode<synchronous>, transform_indices = @transform_0, window_bounds = array<i64: 8, 64>}, {transform_indices = @transform_1, window_bounds = array<i64: 1, 64, 128>}, {pipeline_mode = #tpu.pipeline_mode<synchronous>, transform_indices = @transform_2, window_bounds = array<i64: 8, 1>}, {transform_indices = @transform_3, window_bounds = array<i64: 1, 8, 128>}]} {
    %c0 = arith.constant 0 : index
    %c0_0 = arith.constant 0 : index
    %0 = vector.load %arg3[%c0, %c0_0] : memref<8x64xbf16, #tpu.memory_space<vmem>>, vector<8x64xbf16>
    %c0_1 = arith.constant 0 : index
    %c0_2 = arith.constant 0 : index
    %c0_3 = arith.constant 0 : index
    %1 = vector.load %arg4[%c0_1, %c0_2, %c0_3] : memref<1x64x128xbf16, #tpu.memory_space<vmem>>, vector<1x64x128xbf16>
    %2 = vector.shape_cast %1 : vector<1x64x128xbf16> to vector<64x128xbf16>
    %cst = arith.constant dense<0.000000e+00> : vector<8x128xf32>
    %3 = tpu.matmul %0, %2, %cst {dimension_numbers = #tpu.dot_dimension_numbers<[1], [0], [0], [1], [0, 0, 1, 1], [], []>} : vector<8x64xbf16>, vector<64x128xbf16>, vector<8x128xf32> -> vector<8x128xf32>
    %c0_4 = arith.constant 0 : index
    %c0_5 = arith.constant 0 : index
    %4 = vector.load %arg5[%c0_4, %c0_5] : memref<8x1xf32, #tpu.memory_space<vmem>>, vector<8x1xf32>
    %5 = vector.broadcast %4 : vector<8x1xf32> to vector<8x128xf32>
    %6 = arith.addf %3, %5 : vector<8x128xf32>
    %cst_6 = arith.constant 0.000000e+00 : f32
    %7 = vector.broadcast %cst_6 : f32 to vector<8x128xf32>
    %8 = arith.cmpf oge, %6, %7 : vector<8x128xf32>
    %cst_7 = arith.constant 2.000000e-01 : f32
    %9 = vector.broadcast %cst_7 : f32 to vector<8x128xf32>
    %10 = arith.mulf %9, %6 : vector<8x128xf32>
    %11 = arith.select %8, %6, %10 : vector<8x128xi1>, vector<8x128xf32>
    %c0_8 = arith.constant 0 : index
    %c0_9 = arith.constant 0 : index
    %c0_10 = arith.constant 0 : index
    %12 = vector.load %arg6[%c0_8, %c0_9, %c0_10] : memref<1x8x128xf32, #tpu.memory_space<vmem>>, vector<1x8x128xf32>
    %13 = vector.shape_cast %12 : vector<1x8x128xf32> to vector<8x128xf32>
    %14 = vector.shape_cast %11 : vector<8x128xf32> to vector<1x8x128xf32>
    tpu.vector_store %arg6[%c0_8, %c0_9, %c0_10], %14 {strides = array<i32>} : memref<1x8x128xf32, #tpu.memory_space<vmem>>, vector<1x8x128xf32>,
    return
  }
  func.func @transform_0(%arg0: i32, %arg1: i32, %arg2: i32) -> (i32, i32) {
    %c0_i32 = arith.constant 0 : i32
    %c0_i32_0 = arith.constant 0 : i32
    %c0_i32_1 = arith.constant 0 : i32
    return %c0_i32, %c0_i32_0 : i32, i32
  }
  func.func @transform_1(%arg0: i32, %arg1: i32, %arg2: i32) -> (i32, i32, i32) {
    %c0_i32 = arith.constant 0 : i32
    return %arg0, %arg2, %arg1 : i32, i32, i32
  }
  func.func @transform_2(%arg0: i32, %arg1: i32, %arg2: i32) -> (i32, i32) {
    %c0_i32 = arith.constant 0 : i32
    %c0_i32_0 = arith.constant 0 : i32
    %c0_i32_1 = arith.constant 0 : i32
    return %c0_i32, %c0_i32_0 : i32, i32
  }
  func.func @transform_3(%arg0: i32, %arg1: i32, %arg2: i32) -> (i32, i32, i32) {
    %c0_i32 = arith.constant 0 : i32
    %c0_i32_0 = arith.constant 0 : i32
    return %arg0, %c0_i32, %arg1 : i32, i32, i32
  }
}

</mosaic_0001>

<llo_original>
// kernel: simple_conv_block.1
$region0: #{simple_conv_block.1}
  #allocation0 [shape = 'u32[]', space=smem, size = 0x4, offset = 0x4, fixed_abs, tag = 'smem constant byte address 0x4 - core index']
  #allocation1 [shape = 'u32[72,128]{1,0:T(1,128)}', space=vmem, size = 0x9000, scoped, tag = 'internal scratch']
  %s0 = inlined_call_operand.vmem [shape: bf16[8,64], index: 0, kind: input, shape index: {}]
  %s1 = inlined_call_operand.vmem [shape: bf16[2,64,128], index: 1, kind: input, shape index: {}]
  %s2 = inlined_call_operand.vmem [shape: f32[8,1], index: 2, kind: input, shape index: {}]
  %s3 = inlined_call_operand.vmem [shape: f32[2,8,128], index: 3, kind: output, shape index: {}]
  %s4 = sld [smem:[#allocation0]]
  $region45: #{simple_conv_block.1} parent=0
    _
  %s6 = ssub.s32 1, %s4
  %s7 = scalar_select 0, %s6, %s4
  loop: start=0, step=1, limit=4
  $region2: #{simple_conv_block.1} parent=0 // loop_pre_header
    _
  $region3: #{simple_conv_block.1} parent=0 // loop_header
    %s9 = sphi 0, %s13
    %p10 = scmp.ge.s32.totalorder %s9, 4
    %s16 = sphi 0, %s35
    %s17 = sphi 0, %s31
    %s18 = sphi 0, %s27
    %s19 = sphi 0, %s16
    %s20 = sphi 0, %s17
    %s21 = sphi 0, %s18
    %s22 = sphi 0, %s19
    %s23 = sphi 0, %s20
    %s24 = sphi 0, %s21
    %s36 = sphi 0, %s36
    %s38 = sphi 0, %s36
    %s39 = sphi 0, %s38
    %s53 = sphi 0, %s39
    %s63 = sphi 0, %s65
    %s66 = sphi 0, %s63
    %s67 = sphi 0, %s66
    %s83 = sphi 0, %s67
    %s87 = sphi 0, %s87
    %s89 = sphi 0, %s87
    %s90 = sphi 0, %s89
    %s104 = sphi 0, %s90
    %s112 = sphi 0, %s114
    %s115 = sphi 0, %s112
    %s116 = sphi 0, %s115
    %s132 = sphi 0, %s116
  $region4: #{simple_conv_block.1} parent=0 // loop_header_branch
    %12 = sbr.rel (%p10) target = $region8
  $region5: #{simple_conv_block.1} parent=0 // loop_body
    %s14 = ssub.s32 %s9, 1
    %s15 = ssub.s32 %s9, 2
    %s25 = sadd.s32 1, %s18
    %p26 = scmp.ge.s32.totalorder %s25, 1
    %s27 = scalar_select %p26, 0, %s25
    %s28 = sadd.s32 1, %s17
    %s29 = scalar_select %p26, %s28, %s17
    %p30 = scmp.ge.s32.totalorder %s29, 1
    %s31 = scalar_select %p30, 0, %s29
    %s32 = sadd.s32 1, %s16
    %s33 = scalar_select %p30, %s32, %s16
    %p34 = scmp.ge.s32.totalorder %s33, 2
    %s35 = scalar_select %p34, 0, %s33
    %s37 = sadd.s32 %s36, 1
    %p40 = scmp.eq.s32.totalorder %s9, 1
    %p41 = scmp.ne.s32.totalorder %s36, %s38
    %p42 = scmp.eq.s32.totalorder %s9, 0
    %p43 = por %p41, %p42
    %p44 = scmp.ne.s32.totalorder %s36, %s38
    %p45 = scmp.eq.s32.totalorder %s14, 1
    %p46 = por %p44, %p45
    %p47 = scmp.ne.s32.totalorder %s38, %s39
    %p48 = scmp.eq.s32.totalorder %s14, 0
    %p49 = por %p47, %p48
    %p50 = scmp.ne.s32.totalorder %s38, %s39
    %p51 = scmp.eq.s32.totalorder %s15, 1
    %p52 = por %p50, %p51
    %p54 = scmp.ne.s32.totalorder %s39, %s53
    %p55 = scmp.eq.s32.totalorder %s15, 0
    %p56 = por %p54, %p55
    %s57 = ssub.s32 %s16, %s35
    %s58 = ssub.s32 %s18, %s27
    %s59 = sor.u32 %s57, %s58
    %s60 = ssub.s32 %s17, %s31
    %s61 = sor.u32 %s59, %s60
    %p62 = scmp.eq.s32.totalorder %s61, 0
    %s64 = sadd.s32 %s63, 1
    %s65 = scalar_select %p62, %s63, %s64
    %p68 = pneg %p62
    %p69 = scmp.eq.s32.totalorder %s9, 1
    %p70 = por %p68, %p69
    %p71 = scmp.ne.s32.totalorder %s63, %s66
    %p72 = scmp.eq.s32.totalorder %s9, 0
    %p73 = por %p71, %p72
    %p74 = scmp.ne.s32.totalorder %s63, %s66
    %p75 = scmp.eq.s32.totalorder %s14, 1
    %p76 = por %p74, %p75
    %p77 = scmp.ne.s32.totalorder %s66, %s67
    %p78 = scmp.eq.s32.totalorder %s14, 0
    %p79 = por %p77, %p78
    %p80 = scmp.ne.s32.totalorder %s66, %s67
    %p81 = scmp.eq.s32.totalorder %s15, 1
    %p82 = por %p80, %p81
    %p84 = scmp.ne.s32.totalorder %s67, %s83
    %p85 = scmp.eq.s32.totalorder %s15, 0
    %p86 = por %p84, %p85
    %s88 = sadd.s32 %s87, 1
    %p91 = scmp.eq.s32.totalorder %s9, 1
    %p92 = scmp.ne.s32.totalorder %s87, %s89
    %p93 = scmp.eq.s32.totalorder %s9, 0
    %p94 = por %p92, %p93
    %p95 = scmp.ne.s32.totalorder %s87, %s89
    %p96 = scmp.eq.s32.totalorder %s14, 1
    %p97 = por %p95, %p96
    %p98 = scmp.ne.s32.totalorder %s89, %s90
    %p99 = scmp.eq.s32.totalorder %s14, 0
    %p100 = por %p98, %p99
    %p101 = scmp.ne.s32.totalorder %s89, %s90
    %p102 = scmp.eq.s32.totalorder %s15, 1
    %p103 = por %p101, %p102
    %p105 = scmp.ne.s32.totalorder %s90, %s104
    %p106 = scmp.eq.s32.totalorder %s15, 0
    %p107 = por %p105, %p106
    %s108 = ssub.s32 %s16, %s35
    %s109 = ssub.s32 %s17, %s31
    %s110 = sor.u32 %s108, %s109
    %p111 = scmp.eq.s32.totalorder %s110, 0
    %s113 = sadd.s32 %s112, 1
    %s114 = scalar_select %p111, %s112, %s113
    %p117 = pneg %p111
    %p118 = scmp.eq.s32.totalorder %s9, 1
    %p119 = por %p117, %p118
    %p120 = scmp.ne.s32.totalorder %s112, %s115
    %p121 = scmp.eq.s32.totalorder %s9, 0
    %p122 = por %p120, %p121
    %p123 = scmp.ne.s32.totalorder %s112, %s115
    %p124 = scmp.eq.s32.totalorder %s14, 1
    %p125 = por %p123, %p124
    %p126 = scmp.ne.s32.totalorder %s115, %s116
    %p127 = scmp.eq.s32.totalorder %s14, 0
    %p128 = por %p126, %p127
    %p129 = scmp.ne.s32.totalorder %s115, %s116
    %p130 = scmp.eq.s32.totalorder %s15, 1
    %p131 = por %p129, %p130
    %p133 = scmp.ne.s32.totalorder %s116, %s132
    %p134 = scmp.eq.s32.totalorder %s15, 0
    %p135 = por %p133, %p134
    %p136 = scmp.le.s32.totalorder 1, %s9
    %p137 = scmp.lt.s32.totalorder %s9, 3
    %p138 = pnand %p136, %p137
    %p139 = pneg %p138
    // Predicated region
    $region9: #{simple_conv_block.1} parent=5 // pred_check
      _
    $region10: #{simple_conv_block.1} parent=5 // pred_check_branch
      %141 = sbr.rel (%p138) target = $region12
    $region11: #{simple_conv_block.1} parent=5 // pred_region
      %s142 = ssub.s32 %s9, 1
      // Predicated region
      $region13: #{simple_conv_block.1} parent=11 // pred_check
        %p143 = pneg %p49
      $region14: #{simple_conv_block.1} parent=11 // pred_check_branch
        %145 = sbr.rel (%p143) target = $region16
      $region15: #{simple_conv_block.1} parent=11 // pred_region
        _
      $region16: #{simple_conv_block.1} parent=11 // pred_fallthru
        _
      // Predicated region
      $region17: #{simple_conv_block.1} parent=11 // pred_check
        %p146 = pneg %p100
      $region18: #{simple_conv_block.1} parent=11 // pred_check_branch
        %148 = sbr.rel (%p146) target = $region20
      $region19: #{simple_conv_block.1} parent=11 // pred_region
        _
      $region20: #{simple_conv_block.1} parent=11 // pred_fallthru
        _
    $region12: #{simple_conv_block.1} parent=5 // pred_fallthru
      _
    %p149 = scmp.lt.s32.totalorder %s9, 2
    // Predicated region
    $region21: #{simple_conv_block.1} parent=5 // pred_check
      %p150 = pneg %p149
    $region22: #{simple_conv_block.1} parent=5 // pred_check_branch
      %152 = sbr.rel (%p150) target = $region24
    $region23: #{simple_conv_block.1} parent=5 // pred_region
      // Predicated region
      $region25: #{simple_conv_block.1} parent=23 // pred_check
        %p153 = pneg %p73
      $region26: #{simple_conv_block.1} parent=23 // pred_check_branch
        %155 = sbr.rel (%p153) target = $region28
      $region27: #{simple_conv_block.1} parent=23 // pred_region
        %s156 = smul.u32 8, %s18
        %p157 = scmp.lt.s32.totalorder %s16, 1
        %s158 = scalar_select %p157, %s16, 1
        %p159 = scmp.lt.s32.totalorder %s156, 7
        %s160 = scalar_select %p159, %s156, 7
        %p161 = scmp.lt.s32.totalorder %s17, 0
        %s162 = scalar_select %p161, %s17, 0
        %s163 = sadd.s32 %s162, %s160
        %s164 = smul.addr %s158, 8
        %s165 = sadd.s32 %s163, %s164
        %s166 = smul.addr %s165, 4
        %s167 = scalar_lea.vmem %s1, %s166
        %s168 = smul.u32 8, %s18
      $region28: #{simple_conv_block.1} parent=23 // pred_fallthru
        _
    $region24: #{simple_conv_block.1} parent=5 // pred_fallthru
      _
    %p169 = scmp.le.s32.totalorder 1, %s9
    %p170 = scmp.lt.s32.totalorder %s9, 3
    %p171 = pnand %p169, %p170
    %p172 = pneg %p171
    // Predicated region
    $region29: #{simple_conv_block.1} parent=5 // pred_check
      _
    $region30: #{simple_conv_block.1} parent=5 // pred_check_branch
      %174 = sbr.rel (%p171) target = $region32
    $region31: #{simple_conv_block.1} parent=5 // pred_region
      %s175 = ssub.s32 %s9, 1
      %p176 = pneg %p49
      %p177 = pneg %p46
      %s178 = smul.u32 8, %s21
      %p179 = scmp.lt.s32.totalorder %s19, 1
      %s180 = scalar_select %p179, %s19, 1
      %p181 = scmp.lt.s32.totalorder %s178, 7
      %s182 = scalar_select %p181, %s178, 7
      %p183 = scmp.lt.s32.totalorder %s20, 0
      %s184 = scalar_select %p183, %s20, 0
      %s185 = sadd.s32 %s184, %s182
      %s186 = smul.addr %s180, 8
      %s187 = sadd.s32 %s185, %s186
      %s188 = smul.addr %s187, 4
      %s189 = scalar_lea.vmem %s1, %s188
      %p190 = pneg %p79
      %p191 = pneg %p76
      %p192 = pneg %p100
      %p193 = pneg %p97
      %p194 = pneg %p128
      %p195 = pneg %p125
      %p196 = scmp.lt.s32.totalorder %s19, 1
      %s197 = scalar_select %p196, %s19, 1
      %p198 = scmp.lt.s32.totalorder %s20, 0
      %s199 = scalar_select %p198, %s20, 0
      %s200 = sadd.s32 %s199, %s197
      %s201 = smul.addr %s200, 8
      %s202 = scalar_lea.vmem %s3, %s201
      %s203 = smul.u32 8, %s21
      %p204 = scmp.lt.s32.totalorder %s19, 1
      %s205 = scalar_select %p204, %s19, 1
      %p206 = scmp.lt.s32.totalorder %s203, 7
      %s207 = scalar_select %p206, %s203, 7
      %p208 = scmp.lt.s32.totalorder %s20, 0
      %s209 = scalar_select %p208, %s20, 0
      %s210 = sadd.s32 %s209, %s207
      %s211 = smul.addr %s205, 8
      %s212 = sadd.s32 %s210, %s211
      %s213 = smul.addr %s212, 4
      %s214 = scalar_lea.vmem %s1, %s213
      %s215 = smul.u32 8, %s21
      %p216 = scmp.lt.s32.totalorder %s19, 1
      %s217 = scalar_select %p216, %s19, 1
      %p218 = scmp.lt.s32.totalorder %s20, 0
      %s219 = scalar_select %p218, %s20, 0
      %s220 = sadd.s32 %s219, %s217
      %s221 = smul.addr %s220, 8
      %s222 = scalar_lea.vmem %s3, %s221
      %v224 = vld [vmem:[%s0] sm:$0xf]
      %v225 = vld [vmem:[%s214] sm:$0xf]
      %v226 = vld [vmem:[%s214 + $0x4] sm:$0xf]
      %v227 = vld [vmem:[%s214 + $0x8] sm:$0xf]
      %v228 = vld [vmem:[%s214 + $0xc] sm:$0xf]
      %v229 = vld [vmem:[%s214 + $0x10] sm:$0xf]
      %v230 = vld [vmem:[%s214 + $0x14] sm:$0xf]
      %v231 = vld [vmem:[%s214 + $0x18] sm:$0xf]
      %v232 = vld [vmem:[%s214 + $0x1c] sm:$0xf]
      %v233 = vld [vmem:[%s2] sm:$0xff]
      %235 = vset.pattern.permute.xlu0 0
      %236 = vperm.xlu0 %235, %v233
      %v237 = vpop.permute.xlu0 %236
      %v247 = vunpack.c.l.b16 %v225
      %v248 = vunpack.c.l.b16 %v226
      %v249 = vunpack.c.l.b16 %v227
      %v250 = vunpack.c.l.b16 %v228
      %v251 = vunpack.c.l.b16 %v229
      %v252 = vunpack.c.l.b16 %v230
      %v253 = vunpack.c.l.b16 %v231
      %v254 = vunpack.c.l.b16 %v232
      %v255 = vpack.c.b16 %v248, %v247
      %v256 = vpack.c.b16 %v250, %v249
      %v257 = vpack.c.b16 %v252, %v251
      %v258 = vpack.c.b16 %v254, %v253
      %vm263 = vcmask 523264
      %v265 = vsel %vm263, %v224, 0
      %267 = vmatpush.bf16.msra.mxu0 0
      %268 = vmatpush.bf16.msra.mxu0 0
      %269 = vmatpush.bf16.msra.mxu0 0
      %270 = vmatpush.bf16.msra.mxu0 0
      %271 = vmatpush.bf16.msra.mxu0 %v258
      %272 = vmatpush.bf16.msra.mxu0 %v257
      %273 = vmatpush.bf16.msra.mxu0 %v256
      %274 = vmatpush.bf16.msra.mxu0 %v255
      %275 = vmatmul.bf16.gmra.mxu0 %v265
      %v276 = vpop.f32.mrf.mxu0
      %v277 = vadd.f32 %v237, %v276
      %v278 = vpop.f32.mrf.mxu0
      %279 = vdwg.mxu0
      %vm280 = vcmp.ge.f32.partialorder %v277, 0.0
      %v281 = vmul.f32 %v277, 0.2
      %v282 = vsel %vm280, %v277, %v281
      %283 = vst [vmem:[%s222] sm:$0xff] %v282
      %p284 = scmp.lt.s32.totalorder %s19, 1
      %s285 = scalar_select %p284, %s19, 1
      %p286 = scmp.lt.s32.totalorder %s20, 0
      %s287 = scalar_select %p286, %s20, 0
      %s288 = sadd.s32 %s287, %s285
      %s289 = smul.addr %s288, 8
      %s290 = scalar_lea.vmem %s3, %s289
      // Predicated region
      $region33: #{simple_conv_block.1} parent=31 // pred_check
        %p291 = pneg %p125
      $region34: #{simple_conv_block.1} parent=31 // pred_check_branch
        %293 = sbr.rel (%p291) target = $region36
      $region35: #{simple_conv_block.1} parent=31 // pred_region
        _
      $region36: #{simple_conv_block.1} parent=31 // pred_fallthru
        _
    $region32: #{simple_conv_block.1} parent=5 // pred_fallthru
      _
    %p294 = scmp.le.s32.totalorder 2, %s9
    // Predicated region
    $region37: #{simple_conv_block.1} parent=5 // pred_check
      %p295 = pneg %p294
    $region38: #{simple_conv_block.1} parent=5 // pred_check_branch
      %297 = sbr.rel (%p295) target = $region40
    $region39: #{simple_conv_block.1} parent=5 // pred_region
      %s298 = ssub.s32 %s9, 2
      // Predicated region
      $region41: #{simple_conv_block.1} parent=39 // pred_check
        %p299 = pneg %p131
      $region42: #{simple_conv_block.1} parent=39 // pred_check_branch
        %301 = sbr.rel (%p299) target = $region44
      $region43: #{simple_conv_block.1} parent=39 // pred_region
        %p302 = scmp.lt.s32.totalorder %s22, 1
        %s303 = scalar_select %p302, %s22, 1
        %p304 = scmp.lt.s32.totalorder %s23, 0
        %s305 = scalar_select %p304, %s23, 0
        %s306 = sadd.s32 %s305, %s303
        %s307 = smul.addr %s306, 8
        %s308 = scalar_lea.vmem %s3, %s307
      $region44: #{simple_conv_block.1} parent=39 // pred_fallthru
        _
    $region40: #{simple_conv_block.1} parent=5 // pred_fallthru
      _
  $region6: #{simple_conv_block.1} parent=0 // loop_footer
    %s13 = sadd.s32 1, %s9
  $region7: #{simple_conv_block.1} parent=0 // loop_footer_branch
    %8 = sbr.rel target = $region3
  $region8: #{simple_conv_block.1} parent=0 // loop_exit
    _

</llo_original>
